<compile_context>
chip_gen: v6e
topology: v6e:2x2x1
jax: 0.10.0
libtpu: 0.0.40
codegen_flags: <defaults>
</compile_context>

<pallas_src>
import jax
import jax.numpy as jnp
from jax.experimental import pallas as pl
from jax.experimental.pallas import tpu as pltpu


def bmm_kernel(lhs_ref, rhs_ref, out_ref, acc_ref):
    # lhs_ref: (tm, tk), rhs_ref: (tk, tn), out_ref: (tm, tn)  (batch dim squeezed)
    @pl.when(pl.program_id(3) == 0)
    def _():
        acc_ref[...] = jnp.zeros_like(acc_ref)

    acc_ref[...] += jnp.dot(
        lhs_ref[...], rhs_ref[...], preferred_element_type=jnp.float32
    )

    @pl.when(pl.program_id(3) == pl.num_programs(3) - 1)
    def _():
        out_ref[...] = acc_ref[...].astype(out_ref.dtype)


def _pick_tile(dim, preferred, granule):
    """Largest tile <= preferred that is a multiple of `granule` and divides
    `dim` exactly; falls back to the full dim (always legal, no partial blocks)."""
    if dim <= preferred:
        return dim
    t = (preferred // granule) * granule
    while t >= granule:
        if dim % t == 0:
            return t
        t -= granule
    return dim


def batched_matmul(lhs, rhs, *, tm=256, tn=512, tk=512):
    """lhs: (B0, B1, M, K) f32, rhs: (B0, B1, K, N) f32 -> (B0, B1, M, N) f32."""
    assert lhs.ndim == 4 and rhs.ndim == 4
    B0, B1, M, K = lhs.shape
    rB0, rB1, rK, N = rhs.shape
    # TODO(synk): general torch.matmul broadcasting (size-1 batch dims / rank
    # promotion) is not handled; the module's test shapes have matching batch dims.
    assert (B0, B1) == (rB0, rB1) and K == rK

    B = B0 * B1
    lhs3 = lhs.reshape(B, M, K)   # glue: collapse the two batch dims
    rhs3 = rhs.reshape(B, K, N)

    tile_m = _pick_tile(M, tm, 8)     # sublane granule for lhs/out
    tile_n = _pick_tile(N, tn, 128)   # lane granule for rhs/out (lane-dense stores)
    tile_k = _pick_tile(K, tk, 128)   # lane granule for lhs, sublane for rhs

    grid = (B, M // tile_m, N // tile_n, K // tile_k)

    cost = pl.CostEstimate(
        flops=2 * B * M * K * N,
        bytes_accessed=4 * (B * M * K + B * K * N + B * M * N),
        transcendentals=0,
    )

    out3 = pl.pallas_call(
        bmm_kernel,
        out_shape=jax.ShapeDtypeStruct((B, M, N), jnp.float32),
        grid=grid,
        in_specs=[
            # batch dim squeezed out of the kernel refs via `None`
            pl.BlockSpec((None, tile_m, tile_k), lambda b, i, j, k: (b, i, k)),
            pl.BlockSpec((None, tile_k, tile_n), lambda b, i, j, k: (b, k, j)),
        ],
        out_specs=pl.BlockSpec((None, tile_m, tile_n), lambda b, i, j, k: (b, i, j)),
        scratch_shapes=[pltpu.VMEM((tile_m, tile_n), jnp.float32)],
        compiler_params=pltpu.CompilerParams(
            dimension_semantics=("parallel", "parallel", "parallel", "arbitrary"),
        ),
        cost_estimate=cost,
    )(lhs3, rhs3)

    return out3.reshape(B0, B1, M, N)  # glue: restore the two batch dims


if __name__ == "__main__":
    key = jax.random.PRNGKey(0)
    k_lhs, k_rhs = jax.random.split(key)

    # Small shapes consistent with the module: (4, dyn, dyn, dyn) batched matmul.
    B0, B1, M, K, N = 4, 2, 8, 32, 16
    lhs = jax.random.normal(k_lhs, (B0, B1, M, K), dtype=jnp.float32)
    rhs = jax.random.normal(k_rhs, (B0, B1, K, N), dtype=jnp.float32)

    out = batched_matmul(lhs, rhs)
    jax.block_until_ready(out)

    ref = jnp.matmul(lhs, rhs)
    assert out.shape == (B0, B1, M, N)
    assert jnp.allclose(out, ref, atol=1e-5, rtol=1e-5)
    print("KERNEL_OK")
</pallas_src>

<mosaic_0001>
module attributes {stable_mosaic.version = 11 : i64} {
  func.func @bmm_kernel(%arg0: i32, %arg1: i32, %arg2: i32, %arg3: i32, %arg4: memref<1x8x32xf32, #tpu.memory_space<vmem>>, %arg5: memref<1x32x16xf32, #tpu.memory_space<vmem>>, %arg6: memref<1x8x16xf32, #tpu.memory_space<vmem>>, %arg7: memref<8x16xf32, #tpu.memory_space<vmem>>) attributes {dimension_semantics = [#tpu.dimension_semantics<parallel>, #tpu.dimension_semantics<parallel>, #tpu.dimension_semantics<parallel>, #tpu.dimension_semantics<arbitrary>], iteration_bounds = array<i64: 8, 1, 1, 1>, scalar_prefetch = 0 : i64, scratch_operands = 1 : i64, tpu.core_type = #tpu.core_type<tc>, window_params = [{transform_indices = @transform_0, window_bounds = array<i64: 1, 8, 32>}, {transform_indices = @transform_1, window_bounds = array<i64: 1, 32, 16>}, {transform_indices = @transform_2, window_bounds = array<i64: 1, 8, 16>}]} {
    %c0_i32 = arith.constant 0 : i32
    %0 = arith.cmpi eq, %arg3, %c0_i32 : i32
    %1 = arith.extui %0 : i1 to i32
    %c0_i32_0 = arith.constant 0 : i32
    %2 = arith.cmpi ne, %1, %c0_i32_0 : i32
    scf.if %2 {
      %cst_12 = arith.constant 0.000000e+00 : f32
      %14 = vector.broadcast %cst_12 : f32 to vector<8x16xf32>
      %c0_13 = arith.constant 0 : index
      %c0_14 = arith.constant 0 : index
      %15 = vector.load %arg7[%c0_13, %c0_14] : memref<8x16xf32, #tpu.memory_space<vmem>>, vector<8x16xf32>
      tpu.vector_store %arg7[%c0_13, %c0_14], %14 {strides = array<i32>} : memref<8x16xf32, #tpu.memory_space<vmem>>, vector<8x16xf32>,
    } else {
    }
    %c0 = arith.constant 0 : index
    %c0_1 = arith.constant 0 : index
    %3 = vector.load %arg7[%c0, %c0_1] : memref<8x16xf32, #tpu.memory_space<vmem>>, vector<8x16xf32>
    %c0_2 = arith.constant 0 : index
    %c0_3 = arith.constant 0 : index
    %c0_4 = arith.constant 0 : index
    %4 = vector.load %arg4[%c0_2, %c0_3, %c0_4] : memref<1x8x32xf32, #tpu.memory_space<vmem>>, vector<1x8x32xf32>
    %5 = vector.shape_cast %4 : vector<1x8x32xf32> to vector<8x32xf32>
    %c0_5 = arith.constant 0 : index
    %c0_6 = arith.constant 0 : index
    %c0_7 = arith.constant 0 : index
    %6 = vector.load %arg5[%c0_5, %c0_6, %c0_7] : memref<1x32x16xf32, #tpu.memory_space<vmem>>, vector<1x32x16xf32>
    %7 = vector.shape_cast %6 : vector<1x32x16xf32> to vector<32x16xf32>
    %cst = arith.constant dense<0.000000e+00> : vector<8x16xf32>
    %8 = tpu.matmul %5, %7, %cst {dimension_numbers = #tpu.dot_dimension_numbers<[1], [0], [0], [1], [0, 0, 1, 1], [], []>} : vector<8x32xf32>, vector<32x16xf32>, vector<8x16xf32> -> vector<8x16xf32>
    %9 = arith.addf %3, %8 : vector<8x16xf32>
    %c0_8 = arith.constant 0 : index
    %c0_9 = arith.constant 0 : index
    %10 = vector.load %arg7[%c0_8, %c0_9] : memref<8x16xf32, #tpu.memory_space<vmem>>, vector<8x16xf32>
    tpu.vector_store %arg7[%c0_8, %c0_9], %9 {strides = array<i32>} : memref<8x16xf32, #tpu.memory_space<vmem>>, vector<8x16xf32>,
    %c0_i32_10 = arith.constant 0 : i32
    %11 = arith.cmpi eq, %arg3, %c0_i32_10 : i32
    %12 = arith.extui %11 : i1 to i32
    %c0_i32_11 = arith.constant 0 : i32
    %13 = arith.cmpi ne, %12, %c0_i32_11 : i32
    scf.if %13 {
      %c0_12 = arith.constant 0 : index
      %c0_13 = arith.constant 0 : index
      %14 = vector.load %arg7[%c0_12, %c0_13] : memref<8x16xf32, #tpu.memory_space<vmem>>, vector<8x16xf32>
      %c0_14 = arith.constant 0 : index
      %c0_15 = arith.constant 0 : index
      %c0_16 = arith.constant 0 : index
      %15 = vector.load %arg6[%c0_14, %c0_15, %c0_16] : memref<1x8x16xf32, #tpu.memory_space<vmem>>, vector<1x8x16xf32>
      %16 = vector.shape_cast %15 : vector<1x8x16xf32> to vector<8x16xf32>
      %17 = vector.shape_cast %14 : vector<8x16xf32> to vector<1x8x16xf32>
      tpu.vector_store %arg6[%c0_14, %c0_15, %c0_16], %17 {strides = array<i32>} : memref<1x8x16xf32, #tpu.memory_space<vmem>>, vector<1x8x16xf32>,
    } else {
    }
    return
  }
  func.func @transform_0(%arg0: i32, %arg1: i32, %arg2: i32, %arg3: i32) -> (i32, i32, i32) {
    %c0_i32 = arith.constant 0 : i32
    return %arg0, %arg1, %arg3 : i32, i32, i32
  }
  func.func @transform_1(%arg0: i32, %arg1: i32, %arg2: i32, %arg3: i32) -> (i32, i32, i32) {
    %c0_i32 = arith.constant 0 : i32
    return %arg0, %arg3, %arg2 : i32, i32, i32
  }
  func.func @transform_2(%arg0: i32, %arg1: i32, %arg2: i32, %arg3: i32) -> (i32, i32, i32) {
    %c0_i32 = arith.constant 0 : i32
    return %arg0, %arg1, %arg2 : i32, i32, i32
  }
}

</mosaic_0001>

<llo_original>
// kernel: tpu_custom_call.1
$region0: #{tpu_custom_call.1}
  #allocation0 [shape = 'u32[]', space=smem, size = 0x4, offset = 0x4, fixed_abs, tag = 'smem constant byte address 0x4 - core index']
  #allocation1 [shape = 'u32[144,128]{1,0:T(1,128)}', space=vmem, size = 0x12000, scoped, tag = 'internal scratch']
  #allocation2 [shape = 'f32[8,16]{1,0:T(8,128)}', space=vmem, size = 0x1000, scoped, tag = 'scratch operand']
  %s0 = inlined_call_operand.vmem [shape: f32[8,8,32], index: 0, kind: input, shape index: {}]
  %s1 = inlined_call_operand.vmem [shape: f32[8,32,16], index: 1, kind: input, shape index: {}]
  %s2 = inlined_call_operand.hbm [shape: f32[8,8,16], index: 2, kind: output, shape index: {}]
  %s3 = sld [smem:[#allocation0]]
  $region49: #{tpu_custom_call.1} parent=0
    _
  %s5 = ssub.s32 1, %s3
  %s6 = scalar_select 0, %s5, %s3
  $region1: #{tpu_custom_call.1} parent=0
    #allocation3 [shape = 'u8[8192]{0}', space=vmem, size = 0x2000, scoped, tag = 'output window, operand 0']
    #allocation4 [shape = 's32[2]{0}', space=sflag, size = 0x8, scoped, tag = 'scoped memory for tpu_custom_call.1']
    %7 = vsyncpa [#allocation4], 0
    %s8 = scalar_lea.sflag [#allocation4], 1
    %9 = vsyncpa %s8, 0
    loop: start=0, step=1, limit=10
    $region2: #{tpu_custom_call.1} parent=1 // loop_pre_header
      _
    $region3: #{tpu_custom_call.1} parent=1 // loop_header
      %s11 = sphi 0, %s15
      %p12 = scmp.ge.s32.totalorder %s11, 10
      %s18 = sphi 0, %s44
      %s19 = sphi 0, %s40
      %s20 = sphi 0, %s36
      %s21 = sphi 0, %s32
      %s22 = sphi 0, %s18
      %s23 = sphi 0, %s19
      %s24 = sphi 0, %s20
      %s25 = sphi 0, %s21
      %s26 = sphi 0, %s22
      %s27 = sphi 0, %s23
      %s28 = sphi 0, %s24
      %s29 = sphi 0, %s25
      %s51 = sphi 0, %s53
      %s54 = sphi 0, %s51
      %s55 = sphi 0, %s54
      %s71 = sphi 0, %s55
      %s81 = sphi 0, %s83
      %s84 = sphi 0, %s81
      %s85 = sphi 0, %s84
      %s101 = sphi 0, %s85
      %s111 = sphi 0, %s113
      %s114 = sphi 0, %s111
      %s115 = sphi 0, %s114
      %s131 = sphi 0, %s115
    $region4: #{tpu_custom_call.1} parent=1 // loop_header_branch
      %14 = sbr.rel (%p12) target = $region8
    $region5: #{tpu_custom_call.1} parent=1 // loop_body
      %s16 = ssub.s32 %s11, 1
      %s17 = ssub.s32 %s11, 2
      %s30 = sadd.s32 1, %s21
      %p31 = scmp.ge.s32.totalorder %s30, 1
      %s32 = scalar_select %p31, 0, %s30
      %s33 = sadd.s32 1, %s20
      %s34 = scalar_select %p31, %s33, %s20
      %p35 = scmp.ge.s32.totalorder %s34, 1
      %s36 = scalar_select %p35, 0, %s34
      %s37 = sadd.s32 1, %s19
      %s38 = scalar_select %p35, %s37, %s19
      %p39 = scmp.ge.s32.totalorder %s38, 1
      %s40 = scalar_select %p39, 0, %s38
      %s41 = sadd.s32 1, %s18
      %s42 = scalar_select %p39, %s41, %s18
      %p43 = scmp.ge.s32.totalorder %s42, 8
      %s44 = scalar_select %p43, 0, %s42
      %s45 = ssub.s32 %s18, %s44
      %s46 = ssub.s32 %s19, %s40
      %s47 = sor.u32 %s45, %s46
      %s48 = ssub.s32 %s21, %s32
      %s49 = sor.u32 %s47, %s48
      %p50 = scmp.eq.s32.totalorder %s49, 0
      %s52 = sadd.s32 %s51, 1
      %s53 = scalar_select %p50, %s51, %s52
      %p56 = pneg %p50
      %p57 = scmp.eq.s32.totalorder %s11, 7
      %p58 = por %p56, %p57
      %p59 = scmp.ne.s32.totalorder %s51, %s54
      %p60 = scmp.eq.s32.totalorder %s11, 0
      %p61 = por %p59, %p60
      %p62 = scmp.ne.s32.totalorder %s51, %s54
      %p63 = scmp.eq.s32.totalorder %s16, 7
      %p64 = por %p62, %p63
      %p65 = scmp.ne.s32.totalorder %s54, %s55
      %p66 = scmp.eq.s32.totalorder %s16, 0
      %p67 = por %p65, %p66
      %p68 = scmp.ne.s32.totalorder %s54, %s55
      %p69 = scmp.eq.s32.totalorder %s17, 7
      %p70 = por %p68, %p69
      %p72 = scmp.ne.s32.totalorder %s55, %s71
      %p73 = scmp.eq.s32.totalorder %s17, 0
      %p74 = por %p72, %p73
      %s75 = ssub.s32 %s18, %s44
      %s76 = ssub.s32 %s21, %s32
      %s77 = sor.u32 %s75, %s76
      %s78 = ssub.s32 %s20, %s36
      %s79 = sor.u32 %s77, %s78
      %p80 = scmp.eq.s32.totalorder %s79, 0
      %s82 = sadd.s32 %s81, 1
      %s83 = scalar_select %p80, %s81, %s82
      %p86 = pneg %p80
      %p87 = scmp.eq.s32.totalorder %s11, 7
      %p88 = por %p86, %p87
      %p89 = scmp.ne.s32.totalorder %s81, %s84
      %p90 = scmp.eq.s32.totalorder %s11, 0
      %p91 = por %p89, %p90
      %p92 = scmp.ne.s32.totalorder %s81, %s84
      %p93 = scmp.eq.s32.totalorder %s16, 7
      %p94 = por %p92, %p93
      %p95 = scmp.ne.s32.totalorder %s84, %s85
      %p96 = scmp.eq.s32.totalorder %s16, 0
      %p97 = por %p95, %p96
      %p98 = scmp.ne.s32.totalorder %s84, %s85
      %p99 = scmp.eq.s32.totalorder %s17, 7
      %p100 = por %p98, %p99
      %p102 = scmp.ne.s32.totalorder %s85, %s101
      %p103 = scmp.eq.s32.totalorder %s17, 0
      %p104 = por %p102, %p103
      %s105 = ssub.s32 %s18, %s44
      %s106 = ssub.s32 %s19, %s40
      %s107 = sor.u32 %s105, %s106
      %s108 = ssub.s32 %s20, %s36
      %s109 = sor.u32 %s107, %s108
      %p110 = scmp.eq.s32.totalorder %s109, 0
      %s112 = sadd.s32 %s111, 1
      %s113 = scalar_select %p110, %s111, %s112
      %p116 = pneg %p110
      %p117 = scmp.eq.s32.totalorder %s11, 7
      %p118 = por %p116, %p117
      %p119 = scmp.ne.s32.totalorder %s111, %s114
      %p120 = scmp.eq.s32.totalorder %s11, 0
      %p121 = por %p119, %p120
      %p122 = scmp.ne.s32.totalorder %s111, %s114
      %p123 = scmp.eq.s32.totalorder %s16, 7
      %p124 = por %p122, %p123
      %p125 = scmp.ne.s32.totalorder %s114, %s115
      %p126 = scmp.eq.s32.totalorder %s16, 0
      %p127 = por %p125, %p126
      %p128 = scmp.ne.s32.totalorder %s114, %s115
      %p129 = scmp.eq.s32.totalorder %s17, 7
      %p130 = por %p128, %p129
      %p132 = scmp.ne.s32.totalorder %s115, %s131
      %p133 = scmp.eq.s32.totalorder %s17, 0
      %p134 = por %p132, %p133
      %p135 = scmp.le.s32.totalorder 1, %s11
      %p136 = scmp.lt.s32.totalorder %s11, 9
      %p137 = pnand %p135, %p136
      %p138 = pneg %p137
      // Predicated region
      $region9: #{tpu_custom_call.1} parent=5 // pred_check
        _
      $region10: #{tpu_custom_call.1} parent=5 // pred_check_branch
        %140 = sbr.rel (%p137) target = $region12
      $region11: #{tpu_custom_call.1} parent=5 // pred_region
        %s141 = ssub.s32 %s11, 1
      $region12: #{tpu_custom_call.1} parent=5 // pred_fallthru
        _
      %p142 = scmp.lt.s32.totalorder %s11, 8
      // Predicated region
      $region13: #{tpu_custom_call.1} parent=5 // pred_check
        %p143 = pneg %p142
      $region14: #{tpu_custom_call.1} parent=5 // pred_check_branch
        %145 = sbr.rel (%p143) target = $region16
      $region15: #{tpu_custom_call.1} parent=5 // pred_region
        // Predicated region
        $region17: #{tpu_custom_call.1} parent=15 // pred_check
          %p146 = pneg %p61
        $region18: #{tpu_custom_call.1} parent=15 // pred_check_branch
          %148 = sbr.rel (%p146) target = $region20
        $region19: #{tpu_custom_call.1} parent=15 // pred_region
          %p149 = scmp.lt.s32.totalorder %s18, 7
          %s150 = scalar_select %p149, %s18, 7
          %p151 = scmp.lt.s32.totalorder %s19, 0
          %s152 = scalar_select %p151, %s19, 0
          %p153 = scmp.lt.s32.totalorder %s21, 0
          %s154 = scalar_select %p153, %s21, 0
          %s155 = sadd.s32 %s154, %s152
          %s156 = sadd.s32 %s155, %s150
          %s157 = smul.addr %s156, 8
          %s158 = scalar_lea.vmem %s0, %s157
        $region20: #{tpu_custom_call.1} parent=15 // pred_fallthru
          _
        // Predicated region
        $region21: #{tpu_custom_call.1} parent=15 // pred_check
          %p159 = pneg %p91
        $region22: #{tpu_custom_call.1} parent=15 // pred_check_branch
          %161 = sbr.rel (%p159) target = $region24
        $region23: #{tpu_custom_call.1} parent=15 // pred_region
          %s162 = smul.u32 4, %s21
          %p163 = scmp.lt.s32.totalorder %s18, 7
          %s164 = scalar_select %p163, %s18, 7
          %p165 = scmp.lt.s32.totalorder %s162, 3
          %s166 = scalar_select %p165, %s162, 3
          %p167 = scmp.lt.s32.totalorder %s20, 0
          %s168 = scalar_select %p167, %s20, 0
          %s169 = sadd.s32 %s168, %s166
          %s170 = smul.addr %s164, 4
          %s171 = sadd.s32 %s169, %s170
          %s172 = smul.addr %s171, 8
          %s173 = scalar_lea.vmem %s1, %s172
          %s174 = smul.u32 4, %s21
        $region24: #{tpu_custom_call.1} parent=15 // pred_fallthru
          _
      $region16: #{tpu_custom_call.1} parent=5 // pred_fallthru
        _
      %p175 = scmp.le.s32.totalorder 1, %s11
      %p176 = scmp.lt.s32.totalorder %s11, 9
      %p177 = pnand %p175, %p176
      %p178 = pneg %p177
      // Predicated region
      $region25: #{tpu_custom_call.1} parent=5 // pred_check
        _
      $region26: #{tpu_custom_call.1} parent=5 // pred_check_branch
        %180 = sbr.rel (%p177) target = $region28
      $region27: #{tpu_custom_call.1} parent=5 // pred_region
        %s181 = ssub.s32 %s11, 1
        %p182 = scmp.lt.s32.totalorder %s22, 7
        %s183 = scalar_select %p182, %s22, 7
        %p184 = scmp.lt.s32.totalorder %s23, 0
        %s185 = scalar_select %p184, %s23, 0
        %p186 = scmp.lt.s32.totalorder %s25, 0
        %s187 = scalar_select %p186, %s25, 0
        %s188 = sadd.s32 %s187, %s185
        %s189 = sadd.s32 %s188, %s183
        %s190 = smul.addr %s189, 8
        %s191 = scalar_lea.vmem %s0, %s190
        %p192 = pneg %p67
        %p193 = pneg %p64
        %s194 = smul.u32 4, %s25
        %p195 = scmp.lt.s32.totalorder %s22, 7
        %s196 = scalar_select %p195, %s22, 7
        %p197 = scmp.lt.s32.totalorder %s194, 3
        %s198 = scalar_select %p197, %s194, 3
        %p199 = scmp.lt.s32.totalorder %s24, 0
        %s200 = scalar_select %p199, %s24, 0
        %s201 = sadd.s32 %s200, %s198
        %s202 = smul.addr %s196, 4
        %s203 = sadd.s32 %s201, %s202
        %s204 = smul.addr %s203, 8
        %s205 = scalar_lea.vmem %s1, %s204
        %p206 = pneg %p97
        %p207 = pneg %p94
        %p208 = pneg %p127
        %p209 = pneg %p124
        %s210 = sand.u32 %s114, 1
        %s211 = scalar_lea.sflag [#allocation4], %s210
        %s212 = sand.u32 %s114, 1
        %s213 = smul.addr %s212, 8
        %s214 = scalar_lea.vmem [#allocation3], %s213
        %p215 = scmp.lt.s32.totalorder %s22, 7
        %s216 = scalar_select %p215, %s22, 7
        %p217 = scmp.lt.s32.totalorder %s23, 0
        %s218 = scalar_select %p217, %s23, 0
        %p219 = scmp.lt.s32.totalorder %s25, 0
        %s220 = scalar_select %p219, %s25, 0
        %s221 = sadd.s32 %s220, %s218
        %s222 = sadd.s32 %s221, %s216
        %s223 = smul.addr %s222, 8
        %s224 = scalar_lea.vmem %s0, %s223
        %s225 = smul.u32 4, %s25
        %p226 = scmp.lt.s32.totalorder %s22, 7
        %s227 = scalar_select %p226, %s22, 7
        %p228 = scmp.lt.s32.totalorder %s225, 3
        %s229 = scalar_select %p228, %s225, 3
        %p230 = scmp.lt.s32.totalorder %s24, 0
        %s231 = scalar_select %p230, %s24, 0
        %s232 = sadd.s32 %s231, %s229
        %s233 = smul.addr %s227, 4
        %s234 = sadd.s32 %s232, %s233
        %s235 = smul.addr %s234, 8
        %s236 = scalar_lea.vmem %s1, %s235
        %s237 = smul.u32 4, %s25
        %p238 = scmp.eq.s32.totalorder %s25, 0
        // Predicated region
        $region29: #{tpu_custom_call.1} parent=27 // pred_check
          %p239 = pneg %p238
        $region30: #{tpu_custom_call.1} parent=27 // pred_check_branch
          %241 = sbr.rel (%p239) target = $region32
        $region31: #{tpu_custom_call.1} parent=27 // pred_region
          %vm242 = vcmask 130048
          %243 = vst.msk [vmem:[#allocation2] sm:$0xff] %vm242, 0.0
        $region32: #{tpu_custom_call.1} parent=27 // pred_fallthru
          _
        %v244 = vld [vmem:[#allocation2] sm:$0xff]
        %v245 = vld [vmem:[%s224] sm:$0xff]
        %v246 = vld [vmem:[%s236] sm:$0xff]
        %v247 = vld [vmem:[%s236 + $0x8] sm:$0xff]
        %v248 = vld [vmem:[%s236 + $0x10] sm:$0xff]
        %v249 = vld [vmem:[%s236 + $0x18] sm:$0xff]
        %vm250 = vcmask 261120
        %v252 = vsel %vm250, %v245, 0
        %254 = vmatprep.subr.mxu0 0.0
        %255 = vmatpush1.msra.mxu0 0.0
        %256 = vmatprep.subr.mxu0 0.0
        %257 = vmatpush1.msra.mxu0 0.0
        %258 = vmatprep.subr.mxu0 0.0
        %259 = vmatpush1.msra.mxu0 0.0
        %260 = vmatprep.subr.mxu0 0.0
        %261 = vmatpush1.msra.mxu0 0.0
        %262 = vmatprep.subr.mxu0 0.0
        %263 = vmatpush1.msra.mxu0 0.0
        %264 = vmatprep.subr.mxu0 0.0
        %265 = vmatpush1.msra.mxu0 0.0
        %266 = vmatprep.subr.mxu0 0.0
        %267 = vmatpush1.msra.mxu0 0.0
        %268 = vmatprep.subr.mxu0 0.0
        %269 = vmatpush1.msra.mxu0 0.0
        %270 = vmatprep.subr.mxu0 0.0
        %271 = vmatpush1.msra.mxu0 0.0
        %272 = vmatprep.subr.mxu0 0.0
        %273 = vmatpush1.msra.mxu0 0.0
        %274 = vmatprep.subr.mxu0 0.0
        %275 = vmatpush1.msra.mxu0 0.0
        %276 = vmatprep.subr.mxu0 0.0
        %277 = vmatpush1.msra.mxu0 0.0
        %278 = vmatprep.subr.mxu0 0.0
        %279 = vmatpush1.msra.mxu0 %v249
        %280 = vmatprep.subr.mxu0 0.0
        %281 = vmatpush1.msra.mxu0 %v248
        %282 = vmatprep.subr.mxu0 0.0
        %283 = vmatpush1.msra.mxu0 %v247
        %284 = vmatprep.subr.mxu0 0.0
        %285 = vmatpush1.msra.mxu0 %v246
        %286 = vmatprep.subr.mxu0 0.0
        %287 = vmatpush2.msra.mxu0 0.0
        %288 = vmatprep.subr.mxu0 0.0
        %289 = vmatpush2.msra.mxu0 0.0
        %290 = vmatprep.subr.mxu0 0.0
        %291 = vmatpush2.msra.mxu0 0.0
        %292 = vmatprep.subr.mxu0 0.0
        %293 = vmatpush2.msra.mxu0 0.0
        %294 = vmatprep.subr.mxu0 0.0
        %295 = vmatpush2.msra.mxu0 0.0
        %296 = vmatprep.subr.mxu0 0.0
        %297 = vmatpush2.msra.mxu0 0.0
        %298 = vmatprep.subr.mxu0 0.0
        %299 = vmatpush2.msra.mxu0 0.0
        %300 = vmatprep.subr.mxu0 0.0
        %301 = vmatpush2.msra.mxu0 0.0
        %302 = vmatprep.subr.mxu0 0.0
        %303 = vmatpush2.msra.mxu0 0.0
        %304 = vmatprep.subr.mxu0 0.0
        %305 = vmatpush2.msra.mxu0 0.0
        %306 = vmatprep.subr.mxu0 0.0
        %307 = vmatpush2.msra.mxu0 0.0
        %308 = vmatprep.subr.mxu0 0.0
        %309 = vmatpush2.msra.mxu0 0.0
        %310 = vmatprep.subr.mxu0 0.0
        %311 = vmatpush2.msra.mxu0 0.0
        %312 = vmatprep.subr.mxu0 0.0
        %313 = vmatpush2.msra.mxu0 0.0
        %314 = vmatprep.subr.mxu0 0.0
        %315 = vmatpush2.msra.mxu0 0.0
        %316 = vmatprep.subr.mxu0 0.0
        %317 = vmatpush2.msra.mxu0 0.0
        %318 = vmatprep.mubr.f32.mxu0 0.0
        %319 = vmatmul.mubr.f32.gmra.mxu0 %v252
        %v320 = vpop.f32.mrf.mxu0
        %v321 = vadd.f32 0.0, %v320
        %v322 = vpop.f32.mrf.mxu0
        %323 = vdwg.mxu0
        %v324 = vadd.f32 %v244, %v321
        %vm325 = vcmask 130048
        %326 = vst.msk [vmem:[#allocation2] sm:$0xff] %vm325, %v324
        // Predicated region
        $region33: #{tpu_custom_call.1} parent=27 // pred_check
          %p327 = pneg %p238
        $region34: #{tpu_custom_call.1} parent=27 // pred_check_branch
          %329 = sbr.rel (%p327) target = $region36
        $region35: #{tpu_custom_call.1} parent=27 // pred_region
          %v330 = vld [vmem:[#allocation2] sm:$0xff]
          %331 = vst.msk [vmem:[%s214] sm:$0xff] %vm325, %v330
        $region36: #{tpu_custom_call.1} parent=27 // pred_fallthru
          _
        %s332 = sand.u32 %s114, 1
        %s333 = scalar_lea.sflag [#allocation4], %s332
        %s334 = sand.u32 %s114, 1
        %s335 = smul.addr %s334, 8
        %s336 = scalar_lea.vmem [#allocation3], %s335
        // Predicated region
        $region37: #{tpu_custom_call.1} parent=27 // pred_check
          %p337 = pneg %p124
        $region38: #{tpu_custom_call.1} parent=27 // pred_check_branch
          %339 = sbr.rel (%p337) target = $region40
        $region39: #{tpu_custom_call.1} parent=27 // pred_region
          %s341 = ssub.s32 128, 128
          %342 = vsyncadd %s333, %s341
          %s343 = sadd.s32 %s24, %s23
          %s344 = sadd.s32 %s343, %s22
          %s345 = smul.addr %s344, 128
          %s346 = scalar_lea.hbm %s2, %s345
          %s348 = sshll.u32 %s336, 4
          %s349 = int_to_ptr.vmem [resolvable:$true] %s348
          %351 = dma.vmem_to_hbm [thread:$0]  %s349, 128, %s346, %s333
        $region40: #{tpu_custom_call.1} parent=27 // pred_fallthru
          _
      $region28: #{tpu_custom_call.1} parent=5 // pred_fallthru
        _
      %p352 = scmp.le.s32.totalorder 2, %s11
      // Predicated region
      $region41: #{tpu_custom_call.1} parent=5 // pred_check
        %p353 = pneg %p352
      $region42: #{tpu_custom_call.1} parent=5 // pred_check_branch
        %355 = sbr.rel (%p353) target = $region44
      $region43: #{tpu_custom_call.1} parent=5 // pred_region
        %s356 = ssub.s32 %s11, 2
        // Predicated region
        $region45: #{tpu_custom_call.1} parent=43 // pred_check
          %p357 = pneg %p130
        $region46: #{tpu_custom_call.1} parent=43 // pred_check_branch
          %359 = sbr.rel (%p357) target = $region48
        $region47: #{tpu_custom_call.1} parent=43 // pred_region
          %s360 = sand.u32 %s115, 1
          %s361 = scalar_lea.sflag [#allocation4], %s360
          %s362 = sand.u32 %s115, 1
          %s363 = smul.addr %s362, 8
          %s364 = scalar_lea.vmem [#allocation3], %s363
          %365 = dma.done %s361, 128
        $region48: #{tpu_custom_call.1} parent=43 // pred_fallthru
          _
      $region44: #{tpu_custom_call.1} parent=5 // pred_fallthru
        _
    $region6: #{tpu_custom_call.1} parent=1 // loop_footer
      %s15 = sadd.s32 1, %s11
    $region7: #{tpu_custom_call.1} parent=1 // loop_footer_branch
      %10 = sbr.rel target = $region3
    $region8: #{tpu_custom_call.1} parent=1 // loop_exit
      _
    %366 = vsyncpa [#allocation4], 1
    %s367 = scalar_lea.sflag [#allocation4], 1
    %368 = vsyncpa %s367, 1

</llo_original>
